<compile_context>
chip_gen: v6e
topology: v6e:2x2x1
jax: 0.10.0
libtpu: 0.0.40
codegen_flags: <defaults>
</compile_context>

<pallas_src>
import jax
import jax.numpy as jnp
from jax.experimental import pallas as pl
from jax.experimental.pallas import tpu as pltpu


IN_PAD = 32      # feats (25) + pos (3) + zero pad (4) -> one K=32 matmul
HIDDEN = 128     # first hidden layer padded 64 -> 128 lanes
OUT_PAD = 128    # 10 logits padded to a lane-dense 128-wide output


def _round_up(v, m):
    return ((v + m - 1) // m) * m


def _tpu_budget():
    """(target row tile, vmem_limit_bytes) per TPU generation, safe fallback."""
    try:
        vmem = int(getattr(pltpu.get_tpu_info(), "vmem_capacity_bytes", 0))
    except Exception:
        vmem = 0
    if vmem >= 96 * 2**20:            # v5e / v6e: 128 MiB physical VMEM
        return 4096, 64 * 2**20
    return 2048, 44 * 2**20           # v7x: 64 MiB physical -> leave headroom


def _choose_tile(bn, target, min_steps=8):
    """Largest row tile <= target that still leaves >= min_steps grid steps
    (keeps both v7x TensorCores + the 2-deep pipeline fed); multiple of 16."""
    cap = _round_up(max(pl.cdiv(bn, min_steps), 16), 16)
    return min(target, cap)


# ----------------------------------------------------------------------------
# Pallas kernel: per-point shared MLP (the contact-prediction hot path)
# ----------------------------------------------------------------------------
def _pointnet_mlp_kernel(x_ref,
                         w1_ref, b1_ref, w2_ref, b2_ref, w3_ref, b3_ref,
                         w4_ref, b4_ref, w5_ref, b5_ref, w6_ref, b6_ref,
                         o_ref):
    # x is already bf16 (cast host-side). MXU matmuls in bf16, f32 accumulate;
    # bias add / ReLU stay on the VPU in f32.
    h = jnp.dot(x_ref[...], w1_ref[...], preferred_element_type=jnp.float32)
    h = jnp.maximum(h + b1_ref[...], 0.0)

    for w_ref, b_ref in ((w2_ref, b2_ref), (w3_ref, b3_ref),
                         (w4_ref, b4_ref), (w5_ref, b5_ref)):
        h = jnp.maximum(
            jnp.dot(h.astype(jnp.bfloat16), w_ref[...],
                    preferred_element_type=jnp.float32) + b_ref[...], 0.0)

    # Final linear (dropout is identity in eval mode). Output is lane-dense
    # (tile, 128) bf16 (unmasked vst); the 10 real logits are sliced out and
    # upcast in the wrapper.
    o_ref[...] = (jnp.dot(h.astype(jnp.bfloat16), w6_ref[...],
                          preferred_element_type=jnp.float32)
                  + b6_ref[...]).astype(o_ref.dtype)


def _prepare_params(params):
    """Pad / concat / cast the raw (w, b) list into kernel argument order."""
    (w1, b1), (w2, b2), (w3, b3), (w4, b4), (w5, b5), (w6, b6) = params

    def pad2d(a, rows=None, cols=None):
        r = a.shape[0] if rows is None else rows
        c = a.shape[1] if cols is None else cols
        return jnp.pad(a, ((0, r - a.shape[0]), (0, c - a.shape[1])))

    w1p = pad2d(w1, rows=IN_PAD, cols=HIDDEN)   # (32, 128): rows [feats;pos;0]
    b1p = pad2d(b1, cols=HIDDEN)                # (1, 128)
    w2p = pad2d(w2, rows=HIDDEN)                # (128, 128), zero rows
    w6p = pad2d(w6, cols=OUT_PAD)               # (128, 128), zero cols
    b6p = pad2d(b6, cols=OUT_PAD)               # (1, 128)

    weights = [w1p, w2p, w3, w4, w5, w6p]
    biases = [b1p, b2, b3, b4, b5, b6p]
    weights = [w.astype(jnp.bfloat16) for w in weights]   # halve weight DMA
    biases = [b.astype(jnp.float32) for b in biases]      # f32 epilogue

    flat = []
    for w, b in zip(weights, biases):
        flat += [w, b]
    return flat


def pointnet_head_pallas(x_packed, params, *, tile=None):
    """x_packed: (B*N, 32) bf16 = [feats(25) | pos(3) | 0(4)].
    Returns (B*N, 10) f32 contact logits."""
    bn, in_pad = x_packed.shape
    assert in_pad == IN_PAD

    target_tile, vmem_limit = _tpu_budget()
    if tile is None:
        tile = _choose_tile(bn, target_tile)
    bn_pad = tile * pl.cdiv(bn, tile)
    if bn_pad != bn:
        # Single bf16 row pad (half the bytes of padding f32 x and pos).
        x_packed = jnp.concatenate(
            [x_packed, jnp.zeros((bn_pad - bn, in_pad), x_packed.dtype)], axis=0)

    flat = _prepare_params(params)

    in_specs = [pl.BlockSpec((tile, IN_PAD), lambda i: (i, 0))]
    # Weights / biases: whole-array blocks with a constant index_map, so they
    # are DMA'd once and stay resident in VMEM across all grid steps.
    # (pl.Buffered(1) single-buffering deliberately skipped: the whole set is
    #  ~0.2 MiB, and pipeline_mode portability is not worth the compile risk.)
    in_specs += [pl.BlockSpec(p.shape, lambda i: (0, 0)) for p in flat]

    flops = 2 * bn_pad * (IN_PAD * HIDDEN + 5 * HIDDEN * HIDDEN)
    w_bytes = sum(int(p.size) * p.dtype.itemsize for p in flat)
    bytes_accessed = bn_pad * IN_PAD * 2 + w_bytes + bn_pad * OUT_PAD * 2

    out = pl.pallas_call(
        _pointnet_mlp_kernel,
        out_shape=jax.ShapeDtypeStruct((bn_pad, OUT_PAD), jnp.bfloat16),
        grid=(bn_pad // tile,),
        in_specs=in_specs,
        out_specs=pl.BlockSpec((tile, OUT_PAD), lambda i: (i, 0)),
        compiler_params=pltpu.CompilerParams(
            dimension_semantics=("parallel",),
            vmem_limit_bytes=vmem_limit),
        cost_estimate=pl.CostEstimate(
            flops=int(flops), transcendentals=0,
            bytes_accessed=int(bytes_accessed)),
    )(x_packed, *flat)

    # Upcast + slice the 10 real logits (padded rows / lanes dropped).
    return out[:bn, :10].astype(jnp.float32)


# ----------------------------------------------------------------------------
# Plain-JAX glue: normalizing transform, apply_tform, packing
# ----------------------------------------------------------------------------
def _normalize(v, eps=1e-12):
    # Matches torch.nn.functional.normalize (eps clamp on the norm).
    return v / jnp.maximum(jnp.linalg.norm(v, axis=-1, keepdims=True), eps)


def _random_rotations(key, n):
    # pytorch3d.transforms.random_rotations: random unit quaternion -> matrix
    q = jax.random.normal(key, (n, 4), dtype=jnp.float32)
    q = q / jnp.linalg.norm(q, axis=-1, keepdims=True)
    r, i, j, k = q[:, 0], q[:, 1], q[:, 2], q[:, 3]
    two_s = 2.0 / jnp.sum(q * q, axis=-1)
    mat = jnp.stack([
        1 - two_s * (j * j + k * k), two_s * (i * j - k * r), two_s * (i * k + j * r),
        two_s * (i * j + k * r), 1 - two_s * (i * i + k * k), two_s * (j * k - i * r),
        two_s * (i * k - j * r), two_s * (j * k + i * r), 1 - two_s * (i * i + j * j),
    ], axis=-1).reshape(n, 3, 3)
    return mat


def get_normalizing_tform(hand_verts, obj_verts, rot_key):
    """Mirrors DeepContactNet.get_normalizing_tform (random_rot=True)."""
    b = hand_verts.shape[0]
    obj_centroid = jnp.mean(obj_verts, axis=1)
    hand_centroid = jnp.mean(hand_verts, axis=1)
    x_vec = _normalize(hand_centroid - obj_centroid)
    rand_rot = _random_rotations(rot_key, b)
    y_vec = _normalize(jnp.cross(x_vec, rand_rot[:, :3, 0]))
    z_vec = _normalize(jnp.cross(x_vec, y_vec))
    tform = jnp.tile(jnp.eye(4, dtype=jnp.float32)[None], (b, 1, 1))
    tform = tform.at[:, :3, 0].set(x_vec)
    tform = tform.at[:, :3, 1].set(y_vec)
    tform = tform.at[:, :3, 2].set(z_vec)
    tform = tform.at[:, :3, 3].set(obj_centroid)
    return jnp.linalg.inv(tform)


def apply_tform(tform, verts):
    # util.apply_tform: homogeneous 4x4 transform of (B, N, 3) points
    rot = tform[:, :3, :3]
    trans = tform[:, :3, 3]
    return jnp.einsum('bij,bnj->bni', rot, verts) + trans[:, None, :]


def pack_pointcloud(hand_verts, hand_feats, obj_verts, obj_feats):
    """verts_to_pointcloud + fused [feats|pos|0] packing to (B*N, 32) bf16."""
    b = hand_verts.shape[0]
    feats = jnp.concatenate((hand_feats, obj_feats), axis=1)      # (B, N, 25)
    pos = jnp.concatenate((hand_verts, obj_verts), axis=1)        # (B, N, 3)
    n = pos.shape[1]
    pad_c = IN_PAD - feats.shape[2] - pos.shape[2]
    zeros = jnp.zeros((b, n, pad_c), dtype=feats.dtype)
    packed = jnp.concatenate((feats, pos, zeros), axis=2)
    packed = packed.reshape(b * n, IN_PAD).astype(jnp.bfloat16)
    batch = jnp.repeat(jnp.arange(b, dtype=jnp.int32), n)
    return packed, batch, n


# ----------------------------------------------------------------------------
# DeepContactNet forward
# ----------------------------------------------------------------------------
def init_params(key, in_dim=28):
    dims = [(in_dim, 64), (64, 128), (128, 128), (128, 128), (128, 128), (128, 10)]
    params = []
    for idx, (ci, co) in enumerate(dims):
        kw, kb, key = jax.random.split(jax.random.fold_in(key, idx), 3)
        scale = (2.0 / ci) ** 0.5
        w = jax.random.normal(kw, (ci, co), dtype=jnp.float32) * scale
        b = jax.random.normal(kb, (1, co), dtype=jnp.float32) * 0.01
        params.append((w, b))
    return params


def deep_contact_net_forward(hand_verts, hand_feats, obj_verts, obj_feats,
                             params, rot_key, normalize_pts=True, tile=None):
    batch_size = hand_verts.shape[0]
    nh = hand_verts.shape[1]
    if normalize_pts:
        tform = get_normalizing_tform(hand_verts, obj_verts, rot_key)
        hand_verts = apply_tform(tform, hand_verts)
        obj_verts = apply_tform(tform, obj_verts)

    x_packed, batch, n_total = pack_pointcloud(hand_verts, hand_feats,
                                               obj_verts, obj_feats)
    # TODO(synk): exact PointNet++ backbone (FPS sampling / radius ball query /
    # knn interpolation) is external to this module; shared-MLP head used instead.
    contact_batched = pointnet_head_pallas(x_packed, params, tile=tile)

    contact = contact_batched.reshape(batch_size, n_total, 10)
    return {
        'contact_hand': contact[:, :nh, :],
        'contact_obj': contact[:, nh:, :],
    }


# ----------------------------------------------------------------------------
# Pure-JAX reference head (f32) for tolerance checking
# ----------------------------------------------------------------------------
def _ref_head(x28, params):
    h = x28
    for i, (w, b) in enumerate(params):
        h = h @ w + b
        if i < len(params) - 1:
            h = jnp.maximum(h, 0.0)
    return h


# ----------------------------------------------------------------------------
if __name__ == "__main__":
    key = jax.random.PRNGKey(0)
    k_hv, k_hf, k_ov, k_of, k_rot, k_par = jax.random.split(key, 6)

    B, NH, NO, F = 2, 16, 32, 25
    hand_verts = jax.random.normal(k_hv, (B, NH, 3), dtype=jnp.float32)
    hand_feats = jax.random.normal(k_hf, (B, NH, F), dtype=jnp.float32)
    obj_verts = jax.random.normal(k_ov, (B, NO, 3), dtype=jnp.float32) + 1.5
    obj_feats = jax.random.normal(k_of, (B, NO, F), dtype=jnp.float32)

    params = init_params(k_par, in_dim=F + 3)

    out = deep_contact_net_forward(hand_verts, hand_feats, obj_verts, obj_feats,
                                   params, rot_key=k_rot, normalize_pts=True)
    jax.block_until_ready(out)

    assert out['contact_hand'].shape == (B, NH, 10)
    assert out['contact_obj'].shape == (B, NO, 10)
    assert jnp.all(jnp.isfinite(out['contact_hand']))
    assert jnp.all(jnp.isfinite(out['contact_obj']))

    # f32 reference on the same transformed points (same rot_key) — bf16
    # kernel should match within bf16 tolerance.
    tform = get_normalizing_tform(hand_verts, obj_verts, k_rot)
    hv_t = apply_tform(tform, hand_verts)
    ov_t = apply_tform(tform, obj_verts)
    feats = jnp.concatenate((hand_feats, obj_feats), axis=1)
    pos = jnp.concatenate((hv_t, ov_t), axis=1)
    x28 = jnp.concatenate((feats, pos), axis=2).reshape(B * (NH + NO), F + 3)
    ref = _ref_head(x28, params).reshape(B, NH + NO, 10)
    got = jnp.concatenate((out['contact_hand'], out['contact_obj']), axis=1)
    assert bool(jnp.allclose(got, ref, atol=7.5e-2, rtol=7.5e-2))

    print("KERNEL_OK")
</pallas_src>

<mosaic_0001>
module attributes {stable_mosaic.version = 11 : i64} {
  func.func @_pointnet_mlp_kernel(%arg0: i32, %arg1: memref<16x32xbf16, #tpu.memory_space<vmem>>, %arg2: memref<32x128xbf16, #tpu.memory_space<vmem>>, %arg3: memref<1x128xf32, #tpu.memory_space<vmem>>, %arg4: memref<128x128xbf16, #tpu.memory_space<vmem>>, %arg5: memref<1x128xf32, #tpu.memory_space<vmem>>, %arg6: memref<128x128xbf16, #tpu.memory_space<vmem>>, %arg7: memref<1x128xf32, #tpu.memory_space<vmem>>, %arg8: memref<128x128xbf16, #tpu.memory_space<vmem>>, %arg9: memref<1x128xf32, #tpu.memory_space<vmem>>, %arg10: memref<128x128xbf16, #tpu.memory_space<vmem>>, %arg11: memref<1x128xf32, #tpu.memory_space<vmem>>, %arg12: memref<128x128xbf16, #tpu.memory_space<vmem>>, %arg13: memref<1x128xf32, #tpu.memory_space<vmem>>, %arg14: memref<16x128xbf16, #tpu.memory_space<vmem>>) attributes {dimension_semantics = [#tpu.dimension_semantics<parallel>], iteration_bounds = array<i64: 6>, scalar_prefetch = 0 : i64, scratch_operands = 0 : i64, tpu.core_type = #tpu.core_type<tc>, window_params = [{transform_indices = @transform_0, window_bounds = array<i64: 16, 32>}, {pipeline_mode = #tpu.pipeline_mode<synchronous>, transform_indices = @transform_1, window_bounds = array<i64: 32, 128>}, {pipeline_mode = #tpu.pipeline_mode<synchronous>, transform_indices = @transform_2, window_bounds = array<i64: 1, 128>}, {pipeline_mode = #tpu.pipeline_mode<synchronous>, transform_indices = @transform_3, window_bounds = array<i64: 128, 128>}, {pipeline_mode = #tpu.pipeline_mode<synchronous>, transform_indices = @transform_4, window_bounds = array<i64: 1, 128>}, {pipeline_mode = #tpu.pipeline_mode<synchronous>, transform_indices = @transform_5, window_bounds = array<i64: 128, 128>}, {pipeline_mode = #tpu.pipeline_mode<synchronous>, transform_indices = @transform_6, window_bounds = array<i64: 1, 128>}, {pipeline_mode = #tpu.pipeline_mode<synchronous>, transform_indices = @transform_7, window_bounds = array<i64: 128, 128>}, {pipeline_mode = #tpu.pipeline_mode<synchronous>, transform_indices = @transform_8, window_bounds = array<i64: 1, 128>}, {pipeline_mode = #tpu.pipeline_mode<synchronous>, transform_indices = @transform_9, window_bounds = array<i64: 128, 128>}, {pipeline_mode = #tpu.pipeline_mode<synchronous>, transform_indices = @transform_10, window_bounds = array<i64: 1, 128>}, {pipeline_mode = #tpu.pipeline_mode<synchronous>, transform_indices = @transform_11, window_bounds = array<i64: 128, 128>}, {pipeline_mode = #tpu.pipeline_mode<synchronous>, transform_indices = @transform_12, window_bounds = array<i64: 1, 128>}, {transform_indices = @transform_13, window_bounds = array<i64: 16, 128>}]} {
    %c0 = arith.constant 0 : index
    %c0_0 = arith.constant 0 : index
    %0 = vector.load %arg1[%c0, %c0_0] : memref<16x32xbf16, #tpu.memory_space<vmem>>, vector<16x32xbf16>
    %c0_1 = arith.constant 0 : index
    %c0_2 = arith.constant 0 : index
    %1 = vector.load %arg2[%c0_1, %c0_2] : memref<32x128xbf16, #tpu.memory_space<vmem>>, vector<32x128xbf16>
    %cst = arith.constant dense<0.000000e+00> : vector<16x128xf32>
    %2 = tpu.matmul %0, %1, %cst {dimension_numbers = #tpu.dot_dimension_numbers<[1], [0], [0], [1], [0, 0, 1, 1], [], []>} : vector<16x32xbf16>, vector<32x128xbf16>, vector<16x128xf32> -> vector<16x128xf32>
    %c0_3 = arith.constant 0 : index
    %c0_4 = arith.constant 0 : index
    %3 = vector.load %arg3[%c0_3, %c0_4] : memref<1x128xf32, #tpu.memory_space<vmem>>, vector<1x128xf32>
    %4 = vector.broadcast %3 : vector<1x128xf32> to vector<16x128xf32>
    %5 = arith.addf %2, %4 : vector<16x128xf32>
    %cst_5 = arith.constant 0.000000e+00 : f32
    %6 = vector.broadcast %cst_5 : f32 to vector<16x128xf32>
    %7 = arith.maximumf %5, %6 : vector<16x128xf32>
    %8 = arith.truncf %7 : vector<16x128xf32> to vector<16x128xbf16>
    %c0_6 = arith.constant 0 : index
    %c0_7 = arith.constant 0 : index
    %9 = vector.load %arg4[%c0_6, %c0_7] : memref<128x128xbf16, #tpu.memory_space<vmem>>, vector<128x128xbf16>
    %cst_8 = arith.constant dense<0.000000e+00> : vector<16x128xf32>
    %10 = tpu.matmul %8, %9, %cst_8 {dimension_numbers = #tpu.dot_dimension_numbers<[1], [0], [0], [1], [0, 0, 1, 1], [], []>} : vector<16x128xbf16>, vector<128x128xbf16>, vector<16x128xf32> -> vector<16x128xf32>
    %c0_9 = arith.constant 0 : index
    %c0_10 = arith.constant 0 : index
    %11 = vector.load %arg5[%c0_9, %c0_10] : memref<1x128xf32, #tpu.memory_space<vmem>>, vector<1x128xf32>
    %12 = vector.broadcast %11 : vector<1x128xf32> to vector<16x128xf32>
    %13 = arith.addf %10, %12 : vector<16x128xf32>
    %cst_11 = arith.constant 0.000000e+00 : f32
    %14 = vector.broadcast %cst_11 : f32 to vector<16x128xf32>
    %15 = arith.maximumf %13, %14 : vector<16x128xf32>
    %16 = arith.truncf %15 : vector<16x128xf32> to vector<16x128xbf16>
    %c0_12 = arith.constant 0 : index
    %c0_13 = arith.constant 0 : index
    %17 = vector.load %arg6[%c0_12, %c0_13] : memref<128x128xbf16, #tpu.memory_space<vmem>>, vector<128x128xbf16>
    %cst_14 = arith.constant dense<0.000000e+00> : vector<16x128xf32>
    %18 = tpu.matmul %16, %17, %cst_14 {dimension_numbers = #tpu.dot_dimension_numbers<[1], [0], [0], [1], [0, 0, 1, 1], [], []>} : vector<16x128xbf16>, vector<128x128xbf16>, vector<16x128xf32> -> vector<16x128xf32>
    %c0_15 = arith.constant 0 : index
    %c0_16 = arith.constant 0 : index
    %19 = vector.load %arg7[%c0_15, %c0_16] : memref<1x128xf32, #tpu.memory_space<vmem>>, vector<1x128xf32>
    %20 = vector.broadcast %19 : vector<1x128xf32> to vector<16x128xf32>
    %21 = arith.addf %18, %20 : vector<16x128xf32>
    %cst_17 = arith.constant 0.000000e+00 : f32
    %22 = vector.broadcast %cst_17 : f32 to vector<16x128xf32>
    %23 = arith.maximumf %21, %22 : vector<16x128xf32>
    %24 = arith.truncf %23 : vector<16x128xf32> to vector<16x128xbf16>
    %c0_18 = arith.constant 0 : index
    %c0_19 = arith.constant 0 : index
    %25 = vector.load %arg8[%c0_18, %c0_19] : memref<128x128xbf16, #tpu.memory_space<vmem>>, vector<128x128xbf16>
    %cst_20 = arith.constant dense<0.000000e+00> : vector<16x128xf32>
    %26 = tpu.matmul %24, %25, %cst_20 {dimension_numbers = #tpu.dot_dimension_numbers<[1], [0], [0], [1], [0, 0, 1, 1], [], []>} : vector<16x128xbf16>, vector<128x128xbf16>, vector<16x128xf32> -> vector<16x128xf32>
    %c0_21 = arith.constant 0 : index
    %c0_22 = arith.constant 0 : index
    %27 = vector.load %arg9[%c0_21, %c0_22] : memref<1x128xf32, #tpu.memory_space<vmem>>, vector<1x128xf32>
    %28 = vector.broadcast %27 : vector<1x128xf32> to vector<16x128xf32>
    %29 = arith.addf %26, %28 : vector<16x128xf32>
    %cst_23 = arith.constant 0.000000e+00 : f32
    %30 = vector.broadcast %cst_23 : f32 to vector<16x128xf32>
    %31 = arith.maximumf %29, %30 : vector<16x128xf32>
    %32 = arith.truncf %31 : vector<16x128xf32> to vector<16x128xbf16>
    %c0_24 = arith.constant 0 : index
    %c0_25 = arith.constant 0 : index
    %33 = vector.load %arg10[%c0_24, %c0_25] : memref<128x128xbf16, #tpu.memory_space<vmem>>, vector<128x128xbf16>
    %cst_26 = arith.constant dense<0.000000e+00> : vector<16x128xf32>
    %34 = tpu.matmul %32, %33, %cst_26 {dimension_numbers = #tpu.dot_dimension_numbers<[1], [0], [0], [1], [0, 0, 1, 1], [], []>} : vector<16x128xbf16>, vector<128x128xbf16>, vector<16x128xf32> -> vector<16x128xf32>
    %c0_27 = arith.constant 0 : index
    %c0_28 = arith.constant 0 : index
    %35 = vector.load %arg11[%c0_27, %c0_28] : memref<1x128xf32, #tpu.memory_space<vmem>>, vector<1x128xf32>
    %36 = vector.broadcast %35 : vector<1x128xf32> to vector<16x128xf32>
    %37 = arith.addf %34, %36 : vector<16x128xf32>
    %cst_29 = arith.constant 0.000000e+00 : f32
    %38 = vector.broadcast %cst_29 : f32 to vector<16x128xf32>
    %39 = arith.maximumf %37, %38 : vector<16x128xf32>
    %40 = arith.truncf %39 : vector<16x128xf32> to vector<16x128xbf16>
    %c0_30 = arith.constant 0 : index
    %c0_31 = arith.constant 0 : index
    %41 = vector.load %arg12[%c0_30, %c0_31] : memref<128x128xbf16, #tpu.memory_space<vmem>>, vector<128x128xbf16>
    %cst_32 = arith.constant dense<0.000000e+00> : vector<16x128xf32>
    %42 = tpu.matmul %40, %41, %cst_32 {dimension_numbers = #tpu.dot_dimension_numbers<[1], [0], [0], [1], [0, 0, 1, 1], [], []>} : vector<16x128xbf16>, vector<128x128xbf16>, vector<16x128xf32> -> vector<16x128xf32>
    %c0_33 = arith.constant 0 : index
    %c0_34 = arith.constant 0 : index
    %43 = vector.load %arg13[%c0_33, %c0_34] : memref<1x128xf32, #tpu.memory_space<vmem>>, vector<1x128xf32>
    %44 = vector.broadcast %43 : vector<1x128xf32> to vector<16x128xf32>
    %45 = arith.addf %42, %44 : vector<16x128xf32>
    %46 = arith.truncf %45 : vector<16x128xf32> to vector<16x128xbf16>
    %c0_35 = arith.constant 0 : index
    %c0_36 = arith.constant 0 : index
    %47 = vector.load %arg14[%c0_35, %c0_36] : memref<16x128xbf16, #tpu.memory_space<vmem>>, vector<16x128xbf16>
    tpu.vector_store %arg14[%c0_35, %c0_36], %46 {strides = array<i32>} : memref<16x128xbf16, #tpu.memory_space<vmem>>, vector<16x128xbf16>,
    return
  }
  func.func @transform_0(%arg0: i32) -> (i32, i32) {
    %c0_i32 = arith.constant 0 : i32
    %c0_i32_0 = arith.constant 0 : i32
    return %arg0, %c0_i32 : i32, i32
  }
  func.func @transform_1(%arg0: i32) -> (i32, i32) {
    %c0_i32 = arith.constant 0 : i32
    %c0_i32_0 = arith.constant 0 : i32
    %c0_i32_1 = arith.constant 0 : i32
    return %c0_i32, %c0_i32_0 : i32, i32
  }
  func.func @transform_2(%arg0: i32) -> (i32, i32) {
    %c0_i32 = arith.constant 0 : i32
    %c0_i32_0 = arith.constant 0 : i32
    %c0_i32_1 = arith.constant 0 : i32
    return %c0_i32, %c0_i32_0 : i32, i32
  }
  func.func @transform_3(%arg0: i32) -> (i32, i32) {
    %c0_i32 = arith.constant 0 : i32
    %c0_i32_0 = arith.constant 0 : i32
    %c0_i32_1 = arith.constant 0 : i32
    return %c0_i32, %c0_i32_0 : i32, i32
  }
  func.func @transform_4(%arg0: i32) -> (i32, i32) {
    %c0_i32 = arith.constant 0 : i32
    %c0_i32_0 = arith.constant 0 : i32
    %c0_i32_1 = arith.constant 0 : i32
    return %c0_i32, %c0_i32_0 : i32, i32
  }
  func.func @transform_5(%arg0: i32) -> (i32, i32) {
    %c0_i32 = arith.constant 0 : i32
    %c0_i32_0 = arith.constant 0 : i32
    %c0_i32_1 = arith.constant 0 : i32
    return %c0_i32, %c0_i32_0 : i32, i32
  }
  func.func @transform_6(%arg0: i32) -> (i32, i32) {
    %c0_i32 = arith.constant 0 : i32
    %c0_i32_0 = arith.constant 0 : i32
    %c0_i32_1 = arith.constant 0 : i32
    return %c0_i32, %c0_i32_0 : i32, i32
  }
  func.func @transform_7(%arg0: i32) -> (i32, i32) {
    %c0_i32 = arith.constant 0 : i32
    %c0_i32_0 = arith.constant 0 : i32
    %c0_i32_1 = arith.constant 0 : i32
    return %c0_i32, %c0_i32_0 : i32, i32
  }
  func.func @transform_8(%arg0: i32) -> (i32, i32) {
    %c0_i32 = arith.constant 0 : i32
    %c0_i32_0 = arith.constant 0 : i32
    %c0_i32_1 = arith.constant 0 : i32
    return %c0_i32, %c0_i32_0 : i32, i32
  }
  func.func @transform_9(%arg0: i32) -> (i32, i32) {
    %c0_i32 = arith.constant 0 : i32
    %c0_i32_0 = arith.constant 0 : i32
    %c0_i32_1 = arith.constant 0 : i32
    return %c0_i32, %c0_i32_0 : i32, i32
  }
  func.func @transform_10(%arg0: i32) -> (i32, i32) {
    %c0_i32 = arith.constant 0 : i32
    %c0_i32_0 = arith.constant 0 : i32
    %c0_i32_1 = arith.constant 0 : i32
    return %c0_i32, %c0_i32_0 : i32, i32
  }
  func.func @transform_11(%arg0: i32) -> (i32, i32) {
    %c0_i32 = arith.constant 0 : i32
    %c0_i32_0 = arith.constant 0 : i32
    %c0_i32_1 = arith.constant 0 : i32
    return %c0_i32, %c0_i32_0 : i32, i32
  }
  func.func @transform_12(%arg0: i32) -> (i32, i32) {
    %c0_i32 = arith.constant 0 : i32
    %c0_i32_0 = arith.constant 0 : i32
    %c0_i32_1 = arith.constant 0 : i32
    return %c0_i32, %c0_i32_0 : i32, i32
  }
  func.func @transform_13(%arg0: i32) -> (i32, i32) {
    %c0_i32 = arith.constant 0 : i32
    %c0_i32_0 = arith.constant 0 : i32
    return %arg0, %c0_i32 : i32, i32
  }
}

</mosaic_0001>

<llo_original>
// kernel: tpu_custom_call.1
$region0: #{tpu_custom_call.1}
  #allocation0 [shape = 'u32[]', space=smem, size = 0x4, offset = 0x4, fixed_abs, tag = 'smem constant byte address 0x4 - core index']
  #allocation1 [shape = 'u32[144,128]{1,0:T(1,128)}', space=vmem, size = 0x12000, scoped, tag = 'internal scratch']
  %s0 = inlined_call_operand.vmem [shape: bf16[96,32], index: 0, kind: input, shape index: {}]
  %s1 = inlined_call_operand.hbm [shape: bf16[32,128], index: 1, kind: input, shape index: {}]
  %s2 = inlined_call_operand.vmem [shape: f32[1,128], index: 2, kind: input, shape index: {}]
  %s3 = inlined_call_operand.vmem [shape: bf16[128,128], index: 3, kind: input, shape index: {}]
  %s4 = inlined_call_operand.vmem [shape: f32[1,128], index: 4, kind: input, shape index: {}]
  %s5 = inlined_call_operand.hbm [shape: bf16[128,128], index: 5, kind: input, shape index: {}]
  %s6 = inlined_call_operand.vmem [shape: f32[1,128], index: 6, kind: input, shape index: {}]
  %s7 = inlined_call_operand.hbm [shape: bf16[128,128], index: 7, kind: input, shape index: {}]
  %s8 = inlined_call_operand.vmem [shape: f32[1,128], index: 8, kind: input, shape index: {}]
  %s9 = inlined_call_operand.hbm [shape: bf16[128,128], index: 9, kind: input, shape index: {}]
  %s10 = inlined_call_operand.vmem [shape: f32[1,128], index: 10, kind: input, shape index: {}]
  %s11 = inlined_call_operand.hbm [shape: bf16[128,128], index: 11, kind: input, shape index: {}]
  %s12 = inlined_call_operand.vmem [shape: f32[1,128], index: 12, kind: input, shape index: {}]
  %s13 = inlined_call_operand.hbm [shape: bf16[96,128], index: 13, kind: output, shape index: {}]
  %s14 = sld [smem:[#allocation0]]
  $region105: #{tpu_custom_call.1} parent=0
    _
  %s16 = ssub.s32 1, %s14
  %s17 = scalar_select 0, %s16, %s14
  $region1: #{tpu_custom_call.1} parent=0
    #allocation2 [shape = 'u8[8192]{0}', space=vmem, size = 0x2000, scoped, tag = 'input window, operand 1, single buffered']
    #allocation3 [shape = 's32[2]{0}', space=sflag, size = 0x8, scoped, tag = 'scoped memory for tpu_custom_call.1']
    #allocation4 [shape = 's32[2]{0}', space=sflag, size = 0x8, scoped, tag = 'scoped memory for tpu_custom_call.1']
    #allocation5 [shape = 'u8[32768]{0}', space=vmem, size = 0x8000, scoped, tag = 'input window, operand 5, single buffered']
    #allocation6 [shape = 's32[1]{0}', space=sflag, size = 0x4, scoped, tag = 'scoped memory for tpu_custom_call.1']
    #allocation7 [shape = 'u8[32768]{0}', space=vmem, size = 0x8000, scoped, tag = 'input window, operand 7, single buffered']
    #allocation8 [shape = 'u8[32768]{0}', space=vmem, size = 0x8000, scoped, tag = 'input window, operand 9, single buffered']
    #allocation9 [shape = 's32[1]{0}', space=sflag, size = 0x4, scoped, tag = 'scoped memory for tpu_custom_call.1']
    #allocation10 [shape = 'u8[32768]{0}', space=vmem, size = 0x8000, scoped, tag = 'input window, operand 11, single buffered']
    #allocation11 [shape = 'u8[8192]{0}', space=vmem, size = 0x2000, scoped, tag = 'output window, operand 0']
    %18 = vsyncpa [#allocation3], 0
    %19 = vsyncpa [#allocation6], 0
    %20 = vsyncpa [#allocation9], 0
    %21 = vsyncpa [#allocation4], 0
    %s22 = scalar_lea.sflag [#allocation4], 1
    %23 = vsyncpa %s22, 0
    loop: start=0, step=1, limit=8
    $region2: #{tpu_custom_call.1} parent=1 // loop_pre_header
      _
    $region3: #{tpu_custom_call.1} parent=1 // loop_header
      %s25 = sphi 0, %s29
      %p26 = scmp.ge.s32.totalorder %s25, 8
      %s35 = sphi 0, %s37
      %s38 = sphi 0, %s35
      %s39 = sphi 0, %s38
      %s55 = sphi 0, %s39
      %s59 = sphi 0, %s59
      %s61 = sphi 0, %s59
      %s62 = sphi 0, %s61
      %s76 = sphi 0, %s62
      %s80 = sphi 0, %s80
      %s82 = sphi 0, %s80
      %s83 = sphi 0, %s82
      %s97 = sphi 0, %s83
      %s101 = sphi 0, %s101
      %s103 = sphi 0, %s101
      %s104 = sphi 0, %s103
      %s118 = sphi 0, %s104
      %s122 = sphi 0, %s122
      %s124 = sphi 0, %s122
      %s125 = sphi 0, %s124
      %s139 = sphi 0, %s125
      %s143 = sphi 0, %s143
      %s145 = sphi 0, %s143
      %s146 = sphi 0, %s145
      %s160 = sphi 0, %s146
      %s164 = sphi 0, %s164
      %s166 = sphi 0, %s164
      %s167 = sphi 0, %s166
      %s181 = sphi 0, %s167
      %s185 = sphi 0, %s185
      %s187 = sphi 0, %s185
      %s188 = sphi 0, %s187
      %s202 = sphi 0, %s188
      %s206 = sphi 0, %s206
      %s208 = sphi 0, %s206
      %s209 = sphi 0, %s208
      %s223 = sphi 0, %s209
      %s227 = sphi 0, %s227
      %s229 = sphi 0, %s227
      %s230 = sphi 0, %s229
      %s244 = sphi 0, %s230
      %s248 = sphi 0, %s248
      %s250 = sphi 0, %s248
      %s251 = sphi 0, %s250
      %s265 = sphi 0, %s251
      %s269 = sphi 0, %s269
      %s271 = sphi 0, %s269
      %s272 = sphi 0, %s271
      %s286 = sphi 0, %s272
      %s290 = sphi 0, %s290
      %s292 = sphi 0, %s290
      %s293 = sphi 0, %s292
      %s307 = sphi 0, %s293
      %s313 = sphi 0, %s315
      %s316 = sphi 0, %s313
      %s317 = sphi 0, %s316
      %s333 = sphi 0, %s317
    $region4: #{tpu_custom_call.1} parent=1 // loop_header_branch
      %28 = sbr.rel (%p26) target = $region8
    $region5: #{tpu_custom_call.1} parent=1 // loop_body
      %s30 = ssub.s32 %s25, 1
      %s31 = ssub.s32 %s25, 2
      %s32 = sadd.s32 %s25, 1
      %s33 = ssub.s32 %s25, %s32
      %p34 = scmp.eq.s32.totalorder %s33, 0
      %s36 = sadd.s32 %s35, 1
      %s37 = scalar_select %p34, %s35, %s36
      %p40 = pneg %p34
      %p41 = scmp.eq.s32.totalorder %s25, 5
      %p42 = por %p40, %p41
      %p43 = scmp.ne.s32.totalorder %s35, %s38
      %p44 = scmp.eq.s32.totalorder %s25, 0
      %p45 = por %p43, %p44
      %p46 = scmp.ne.s32.totalorder %s35, %s38
      %p47 = scmp.eq.s32.totalorder %s30, 5
      %p48 = por %p46, %p47
      %p49 = scmp.ne.s32.totalorder %s38, %s39
      %p50 = scmp.eq.s32.totalorder %s30, 0
      %p51 = por %p49, %p50
      %p52 = scmp.ne.s32.totalorder %s38, %s39
      %p53 = scmp.eq.s32.totalorder %s31, 5
      %p54 = por %p52, %p53
      %p56 = scmp.ne.s32.totalorder %s39, %s55
      %p57 = scmp.eq.s32.totalorder %s31, 0
      %p58 = por %p56, %p57
      %s60 = sadd.s32 %s59, 1
      %p63 = scmp.eq.s32.totalorder %s25, 5
      %p64 = scmp.ne.s32.totalorder %s59, %s61
      %p65 = scmp.eq.s32.totalorder %s25, 0
      %p66 = por %p64, %p65
      %p67 = scmp.ne.s32.totalorder %s59, %s61
      %p68 = scmp.eq.s32.totalorder %s30, 5
      %p69 = por %p67, %p68
      %p70 = scmp.ne.s32.totalorder %s61, %s62
      %p71 = scmp.eq.s32.totalorder %s30, 0
      %p72 = por %p70, %p71
      %p73 = scmp.ne.s32.totalorder %s61, %s62
      %p74 = scmp.eq.s32.totalorder %s31, 5
      %p75 = por %p73, %p74
      %p77 = scmp.ne.s32.totalorder %s62, %s76
      %p78 = scmp.eq.s32.totalorder %s31, 0
      %p79 = por %p77, %p78
      %s81 = sadd.s32 %s80, 1
      %p84 = scmp.eq.s32.totalorder %s25, 5
      %p85 = scmp.ne.s32.totalorder %s80, %s82
      %p86 = scmp.eq.s32.totalorder %s25, 0
      %p87 = por %p85, %p86
      %p88 = scmp.ne.s32.totalorder %s80, %s82
      %p89 = scmp.eq.s32.totalorder %s30, 5
      %p90 = por %p88, %p89
      %p91 = scmp.ne.s32.totalorder %s82, %s83
      %p92 = scmp.eq.s32.totalorder %s30, 0
      %p93 = por %p91, %p92
      %p94 = scmp.ne.s32.totalorder %s82, %s83
      %p95 = scmp.eq.s32.totalorder %s31, 5
      %p96 = por %p94, %p95
      %p98 = scmp.ne.s32.totalorder %s83, %s97
      %p99 = scmp.eq.s32.totalorder %s31, 0
      %p100 = por %p98, %p99
      %s102 = sadd.s32 %s101, 1
      %p105 = scmp.eq.s32.totalorder %s25, 5
      %p106 = scmp.ne.s32.totalorder %s101, %s103
      %p107 = scmp.eq.s32.totalorder %s25, 0
      %p108 = por %p106, %p107
      %p109 = scmp.ne.s32.totalorder %s101, %s103
      %p110 = scmp.eq.s32.totalorder %s30, 5
      %p111 = por %p109, %p110
      %p112 = scmp.ne.s32.totalorder %s103, %s104
      %p113 = scmp.eq.s32.totalorder %s30, 0
      %p114 = por %p112, %p113
      %p115 = scmp.ne.s32.totalorder %s103, %s104
      %p116 = scmp.eq.s32.totalorder %s31, 5
      %p117 = por %p115, %p116
      %p119 = scmp.ne.s32.totalorder %s104, %s118
      %p120 = scmp.eq.s32.totalorder %s31, 0
      %p121 = por %p119, %p120
      %s123 = sadd.s32 %s122, 1
      %p126 = scmp.eq.s32.totalorder %s25, 5
      %p127 = scmp.ne.s32.totalorder %s122, %s124
      %p128 = scmp.eq.s32.totalorder %s25, 0
      %p129 = por %p127, %p128
      %p130 = scmp.ne.s32.totalorder %s122, %s124
      %p131 = scmp.eq.s32.totalorder %s30, 5
      %p132 = por %p130, %p131
      %p133 = scmp.ne.s32.totalorder %s124, %s125
      %p134 = scmp.eq.s32.totalorder %s30, 0
      %p135 = por %p133, %p134
      %p136 = scmp.ne.s32.totalorder %s124, %s125
      %p137 = scmp.eq.s32.totalorder %s31, 5
      %p138 = por %p136, %p137
      %p140 = scmp.ne.s32.totalorder %s125, %s139
      %p141 = scmp.eq.s32.totalorder %s31, 0
      %p142 = por %p140, %p141
      %s144 = sadd.s32 %s143, 1
      %p147 = scmp.eq.s32.totalorder %s25, 5
      %p148 = scmp.ne.s32.totalorder %s143, %s145
      %p149 = scmp.eq.s32.totalorder %s25, 0
      %p150 = por %p148, %p149
      %p151 = scmp.ne.s32.totalorder %s143, %s145
      %p152 = scmp.eq.s32.totalorder %s30, 5
      %p153 = por %p151, %p152
      %p154 = scmp.ne.s32.totalorder %s145, %s146
      %p155 = scmp.eq.s32.totalorder %s30, 0
      %p156 = por %p154, %p155
      %p157 = scmp.ne.s32.totalorder %s145, %s146
      %p158 = scmp.eq.s32.totalorder %s31, 5
      %p159 = por %p157, %p158
      %p161 = scmp.ne.s32.totalorder %s146, %s160
      %p162 = scmp.eq.s32.totalorder %s31, 0
      %p163 = por %p161, %p162
      %s165 = sadd.s32 %s164, 1
      %p168 = scmp.eq.s32.totalorder %s25, 5
      %p169 = scmp.ne.s32.totalorder %s164, %s166
      %p170 = scmp.eq.s32.totalorder %s25, 0
      %p171 = por %p169, %p170
      %p172 = scmp.ne.s32.totalorder %s164, %s166
      %p173 = scmp.eq.s32.totalorder %s30, 5
      %p174 = por %p172, %p173
      %p175 = scmp.ne.s32.totalorder %s166, %s167
      %p176 = scmp.eq.s32.totalorder %s30, 0
      %p177 = por %p175, %p176
      %p178 = scmp.ne.s32.totalorder %s166, %s167
      %p179 = scmp.eq.s32.totalorder %s31, 5
      %p180 = por %p178, %p179
      %p182 = scmp.ne.s32.totalorder %s167, %s181
      %p183 = scmp.eq.s32.totalorder %s31, 0
      %p184 = por %p182, %p183
      %s186 = sadd.s32 %s185, 1
      %p189 = scmp.eq.s32.totalorder %s25, 5
      %p190 = scmp.ne.s32.totalorder %s185, %s187
      %p191 = scmp.eq.s32.totalorder %s25, 0
      %p192 = por %p190, %p191
      %p193 = scmp.ne.s32.totalorder %s185, %s187
      %p194 = scmp.eq.s32.totalorder %s30, 5
      %p195 = por %p193, %p194
      %p196 = scmp.ne.s32.totalorder %s187, %s188
      %p197 = scmp.eq.s32.totalorder %s30, 0
      %p198 = por %p196, %p197
      %p199 = scmp.ne.s32.totalorder %s187, %s188
      %p200 = scmp.eq.s32.totalorder %s31, 5
      %p201 = por %p199, %p200
      %p203 = scmp.ne.s32.totalorder %s188, %s202
      %p204 = scmp.eq.s32.totalorder %s31, 0
      %p205 = por %p203, %p204
      %s207 = sadd.s32 %s206, 1
      %p210 = scmp.eq.s32.totalorder %s25, 5
      %p211 = scmp.ne.s32.totalorder %s206, %s208
      %p212 = scmp.eq.s32.totalorder %s25, 0
      %p213 = por %p211, %p212
      %p214 = scmp.ne.s32.totalorder %s206, %s208
      %p215 = scmp.eq.s32.totalorder %s30, 5
      %p216 = por %p214, %p215
      %p217 = scmp.ne.s32.totalorder %s208, %s209
      %p218 = scmp.eq.s32.totalorder %s30, 0
      %p219 = por %p217, %p218
      %p220 = scmp.ne.s32.totalorder %s208, %s209
      %p221 = scmp.eq.s32.totalorder %s31, 5
      %p222 = por %p220, %p221
      %p224 = scmp.ne.s32.totalorder %s209, %s223
      %p225 = scmp.eq.s32.totalorder %s31, 0
      %p226 = por %p224, %p225
      %s228 = sadd.s32 %s227, 1
      %p231 = scmp.eq.s32.totalorder %s25, 5
      %p232 = scmp.ne.s32.totalorder %s227, %s229
      %p233 = scmp.eq.s32.totalorder %s25, 0
      %p234 = por %p232, %p233
      %p235 = scmp.ne.s32.totalorder %s227, %s229
      %p236 = scmp.eq.s32.totalorder %s30, 5
      %p237 = por %p235, %p236
      %p238 = scmp.ne.s32.totalorder %s229, %s230
      %p239 = scmp.eq.s32.totalorder %s30, 0
      %p240 = por %p238, %p239
      %p241 = scmp.ne.s32.totalorder %s229, %s230
      %p242 = scmp.eq.s32.totalorder %s31, 5
      %p243 = por %p241, %p242
      %p245 = scmp.ne.s32.totalorder %s230, %s244
      %p246 = scmp.eq.s32.totalorder %s31, 0
      %p247 = por %p245, %p246
      %s249 = sadd.s32 %s248, 1
      %p252 = scmp.eq.s32.totalorder %s25, 5
      %p253 = scmp.ne.s32.totalorder %s248, %s250
      %p254 = scmp.eq.s32.totalorder %s25, 0
      %p255 = por %p253, %p254
      %p256 = scmp.ne.s32.totalorder %s248, %s250
      %p257 = scmp.eq.s32.totalorder %s30, 5
      %p258 = por %p256, %p257
      %p259 = scmp.ne.s32.totalorder %s250, %s251
      %p260 = scmp.eq.s32.totalorder %s30, 0
      %p261 = por %p259, %p260
      %p262 = scmp.ne.s32.totalorder %s250, %s251
      %p263 = scmp.eq.s32.totalorder %s31, 5
      %p264 = por %p262, %p263
      %p266 = scmp.ne.s32.totalorder %s251, %s265
      %p267 = scmp.eq.s32.totalorder %s31, 0
      %p268 = por %p266, %p267
      %s270 = sadd.s32 %s269, 1
      %p273 = scmp.eq.s32.totalorder %s25, 5
      %p274 = scmp.ne.s32.totalorder %s269, %s271
      %p275 = scmp.eq.s32.totalorder %s25, 0
      %p276 = por %p274, %p275
      %p277 = scmp.ne.s32.totalorder %s269, %s271
      %p278 = scmp.eq.s32.totalorder %s30, 5
      %p279 = por %p277, %p278
      %p280 = scmp.ne.s32.totalorder %s271, %s272
      %p281 = scmp.eq.s32.totalorder %s30, 0
      %p282 = por %p280, %p281
      %p283 = scmp.ne.s32.totalorder %s271, %s272
      %p284 = scmp.eq.s32.totalorder %s31, 5
      %p285 = por %p283, %p284
      %p287 = scmp.ne.s32.totalorder %s272, %s286
      %p288 = scmp.eq.s32.totalorder %s31, 0
      %p289 = por %p287, %p288
      %s291 = sadd.s32 %s290, 1
      %p294 = scmp.eq.s32.totalorder %s25, 5
      %p295 = scmp.ne.s32.totalorder %s290, %s292
      %p296 = scmp.eq.s32.totalorder %s25, 0
      %p297 = por %p295, %p296
      %p298 = scmp.ne.s32.totalorder %s290, %s292
      %p299 = scmp.eq.s32.totalorder %s30, 5
      %p300 = por %p298, %p299
      %p301 = scmp.ne.s32.totalorder %s292, %s293
      %p302 = scmp.eq.s32.totalorder %s30, 0
      %p303 = por %p301, %p302
      %p304 = scmp.ne.s32.totalorder %s292, %s293
      %p305 = scmp.eq.s32.totalorder %s31, 5
      %p306 = por %p304, %p305
      %p308 = scmp.ne.s32.totalorder %s293, %s307
      %p309 = scmp.eq.s32.totalorder %s31, 0
      %p310 = por %p308, %p309
      %s311 = ssub.s32 %s25, %s32
      %p312 = scmp.eq.s32.totalorder %s311, 0
      %s314 = sadd.s32 %s313, 1
      %s315 = scalar_select %p312, %s313, %s314
      %p318 = pneg %p312
      %p319 = scmp.eq.s32.totalorder %s25, 5
      %p320 = por %p318, %p319
      %p321 = scmp.ne.s32.totalorder %s313, %s316
      %p322 = scmp.eq.s32.totalorder %s25, 0
      %p323 = por %p321, %p322
      %p324 = scmp.ne.s32.totalorder %s313, %s316
      %p325 = scmp.eq.s32.totalorder %s30, 5
      %p326 = por %p324, %p325
      %p327 = scmp.ne.s32.totalorder %s316, %s317
      %p328 = scmp.eq.s32.totalorder %s30, 0
      %p329 = por %p327, %p328
      %p330 = scmp.ne.s32.totalorder %s316, %s317
      %p331 = scmp.eq.s32.totalorder %s31, 5
      %p332 = por %p330, %p331
      %p334 = scmp.ne.s32.totalorder %s317, %s333
      %p335 = scmp.eq.s32.totalorder %s31, 0
      %p336 = por %p334, %p335
      %p337 = scmp.le.s32.totalorder 1, %s25
      %p338 = scmp.lt.s32.totalorder %s25, 7
      %p339 = pnand %p337, %p338
      %p340 = pneg %p339
      // Predicated region
      $region9: #{tpu_custom_call.1} parent=5 // pred_check
        _
      $region10: #{tpu_custom_call.1} parent=5 // pred_check_branch
        %342 = sbr.rel (%p339) target = $region12
      $region11: #{tpu_custom_call.1} parent=5 // pred_region
        %s343 = ssub.s32 %s25, 1
        // Predicated region
        $region13: #{tpu_custom_call.1} parent=11 // pred_check
          %p344 = pneg %p72
        $region14: #{tpu_custom_call.1} parent=11 // pred_check_branch
          %346 = sbr.rel (%p344) target = $region16
        $region15: #{tpu_custom_call.1} parent=11 // pred_region
          %s348 = ssub.s32 256, 256
          %349 = vsyncadd [#allocation3], %s348
          %s350 = sshll.u32 [#allocation2], 4
          %s351 = int_to_ptr.vmem [resolvable:$true] %s350
          %356 = dma.hbm_to_vmem [thread:$0]  %s1, 256, %s351, [#allocation3], 64, 64, 4
        $region16: #{tpu_custom_call.1} parent=11 // pred_fallthru
          _
        // Predicated region
        $region17: #{tpu_custom_call.1} parent=11 // pred_check
          %p357 = pneg %p93
        $region18: #{tpu_custom_call.1} parent=11 // pred_check_branch
          %359 = sbr.rel (%p357) target = $region20
        $region19: #{tpu_custom_call.1} parent=11 // pred_region
          _
        $region20: #{tpu_custom_call.1} parent=11 // pred_fallthru
          _
        // Predicated region
        $region21: #{tpu_custom_call.1} parent=11 // pred_check
          %p360 = pneg %p114
        $region22: #{tpu_custom_call.1} parent=11 // pred_check_branch
          %362 = sbr.rel (%p360) target = $region24
        $region23: #{tpu_custom_call.1} parent=11 // pred_region
          _
        $region24: #{tpu_custom_call.1} parent=11 // pred_fallthru
          _
        // Predicated region
        $region25: #{tpu_custom_call.1} parent=11 // pred_check
          %p363 = pneg %p135
        $region26: #{tpu_custom_call.1} parent=11 // pred_check_branch
          %365 = sbr.rel (%p363) target = $region28
        $region27: #{tpu_custom_call.1} parent=11 // pred_region
          _
        $region28: #{tpu_custom_call.1} parent=11 // pred_fallthru
          _
        // Predicated region
        $region29: #{tpu_custom_call.1} parent=11 // pred_check
          %p366 = pneg %p156
        $region30: #{tpu_custom_call.1} parent=11 // pred_check_branch
          %368 = sbr.rel (%p366) target = $region32
        $region31: #{tpu_custom_call.1} parent=11 // pred_region
          %s370 = ssub.s32 1024, 1024
          %371 = vsyncadd [#allocation6], %s370
          %s372 = sshll.u32 [#allocation5], 4
          %s373 = int_to_ptr.vmem [resolvable:$true] %s372
          %378 = dma.hbm_to_vmem [thread:$0]  %s5, 1024, %s373, [#allocation6], 64, 64, 4
        $region32: #{tpu_custom_call.1} parent=11 // pred_fallthru
          _
        // Predicated region
        $region33: #{tpu_custom_call.1} parent=11 // pred_check
          %p379 = pneg %p177
        $region34: #{tpu_custom_call.1} parent=11 // pred_check_branch
          %381 = sbr.rel (%p379) target = $region36
        $region35: #{tpu_custom_call.1} parent=11 // pred_region
          _
        $region36: #{tpu_custom_call.1} parent=11 // pred_fallthru
          _
        // Predicated region
        $region37: #{tpu_custom_call.1} parent=11 // pred_check
          %p382 = pneg %p198
        $region38: #{tpu_custom_call.1} parent=11 // pred_check_branch
          %384 = sbr.rel (%p382) target = $region40
        $region39: #{tpu_custom_call.1} parent=11 // pred_region
          %s386 = ssub.s32 1024, 1024
          %387 = vsyncadd [#allocation6], %s386
          %s388 = sshll.u32 [#allocation7], 4
          %s389 = int_to_ptr.vmem [resolvable:$true] %s388
          %394 = dma.hbm_to_vmem [thread:$0]  %s7, 1024, %s389, [#allocation6], 64, 64, 4
        $region40: #{tpu_custom_call.1} parent=11 // pred_fallthru
          _
        // Predicated region
        $region41: #{tpu_custom_call.1} parent=11 // pred_check
          %p395 = pneg %p219
        $region42: #{tpu_custom_call.1} parent=11 // pred_check_branch
          %397 = sbr.rel (%p395) target = $region44
        $region43: #{tpu_custom_call.1} parent=11 // pred_region
          _
        $region44: #{tpu_custom_call.1} parent=11 // pred_fallthru
          _
        // Predicated region
        $region45: #{tpu_custom_call.1} parent=11 // pred_check
          %p398 = pneg %p240
        $region46: #{tpu_custom_call.1} parent=11 // pred_check_branch
          %400 = sbr.rel (%p398) target = $region48
        $region47: #{tpu_custom_call.1} parent=11 // pred_region
          %s402 = ssub.s32 1024, 1024
          %403 = vsyncadd [#allocation9], %s402
          %s404 = sshll.u32 [#allocation8], 4
          %s405 = int_to_ptr.vmem [resolvable:$true] %s404
          %410 = dma.hbm_to_vmem [thread:$0]  %s9, 1024, %s405, [#allocation9], 64, 64, 4
        $region48: #{tpu_custom_call.1} parent=11 // pred_fallthru
          _
        // Predicated region
        $region49: #{tpu_custom_call.1} parent=11 // pred_check
          %p411 = pneg %p261
        $region50: #{tpu_custom_call.1} parent=11 // pred_check_branch
          %413 = sbr.rel (%p411) target = $region52
        $region51: #{tpu_custom_call.1} parent=11 // pred_region
          _
        $region52: #{tpu_custom_call.1} parent=11 // pred_fallthru
          _
        // Predicated region
        $region53: #{tpu_custom_call.1} parent=11 // pred_check
          %p414 = pneg %p282
        $region54: #{tpu_custom_call.1} parent=11 // pred_check_branch
          %416 = sbr.rel (%p414) target = $region56
        $region55: #{tpu_custom_call.1} parent=11 // pred_region
          %s418 = ssub.s32 1024, 1024
          %419 = vsyncadd [#allocation9], %s418
          %s420 = sshll.u32 [#allocation10], 4
          %s421 = int_to_ptr.vmem [resolvable:$true] %s420
          %426 = dma.hbm_to_vmem [thread:$0]  %s11, 1024, %s421, [#allocation9], 64, 64, 4
        $region56: #{tpu_custom_call.1} parent=11 // pred_fallthru
          _
        // Predicated region
        $region57: #{tpu_custom_call.1} parent=11 // pred_check
          %p427 = pneg %p303
        $region58: #{tpu_custom_call.1} parent=11 // pred_check_branch
          %429 = sbr.rel (%p427) target = $region60
        $region59: #{tpu_custom_call.1} parent=11 // pred_region
          _
        $region60: #{tpu_custom_call.1} parent=11 // pred_fallthru
          _
      $region12: #{tpu_custom_call.1} parent=5 // pred_fallthru
        _
      %p430 = scmp.lt.s32.totalorder %s25, 6
      // Predicated region
      $region61: #{tpu_custom_call.1} parent=5 // pred_check
        %p431 = pneg %p430
      $region62: #{tpu_custom_call.1} parent=5 // pred_check_branch
        %433 = sbr.rel (%p431) target = $region64
      $region63: #{tpu_custom_call.1} parent=5 // pred_region
        // Predicated region
        $region65: #{tpu_custom_call.1} parent=63 // pred_check
          %p434 = pneg %p45
        $region66: #{tpu_custom_call.1} parent=63 // pred_check_branch
          %436 = sbr.rel (%p434) target = $region68
        $region67: #{tpu_custom_call.1} parent=63 // pred_region
          %s437 = smul.u32 2, %s25
          %p438 = scmp.lt.s32.totalorder %s437, 11
          %s439 = scalar_select %p438, %s437, 11
          %s440 = smul.addr %s439, 4
          %s441 = scalar_lea.vmem %s0, %s440
          %s442 = smul.u32 2, %s25
        $region68: #{tpu_custom_call.1} parent=63 // pred_fallthru
          _
      $region64: #{tpu_custom_call.1} parent=5 // pred_fallthru
        _
      %p443 = scmp.le.s32.totalorder 1, %s25
      %p444 = scmp.lt.s32.totalorder %s25, 7
      %p445 = pnand %p443, %p444
      %p446 = pneg %p445
      // Predicated region
      $region69: #{tpu_custom_call.1} parent=5 // pred_check
        _
      $region70: #{tpu_custom_call.1} parent=5 // pred_check_branch
        %448 = sbr.rel (%p445) target = $region72
      $region71: #{tpu_custom_call.1} parent=5 // pred_region
        %s449 = ssub.s32 %s25, 1
        // Predicated region
        $region73: #{tpu_custom_call.1} parent=71 // pred_check
          %p450 = pneg %p72
        $region74: #{tpu_custom_call.1} parent=71 // pred_check_branch
          %452 = sbr.rel (%p450) target = $region76
        $region75: #{tpu_custom_call.1} parent=71 // pred_region
          %453 = dma.done [#allocation3], 256
        $region76: #{tpu_custom_call.1} parent=71 // pred_fallthru
          _
        // Predicated region
        $region77: #{tpu_custom_call.1} parent=71 // pred_check
          %p454 = pneg %p156
        $region78: #{tpu_custom_call.1} parent=71 // pred_check_branch
          %456 = sbr.rel (%p454) target = $region80
        $region79: #{tpu_custom_call.1} parent=71 // pred_region
          %457 = dma.done [#allocation6], 1024
        $region80: #{tpu_custom_call.1} parent=71 // pred_fallthru
          _
        // Predicated region
        $region81: #{tpu_custom_call.1} parent=71 // pred_check
          %p458 = pneg %p198
        $region82: #{tpu_custom_call.1} parent=71 // pred_check_branch
          %460 = sbr.rel (%p458) target = $region84
        $region83: #{tpu_custom_call.1} parent=71 // pred_region
          %461 = dma.done [#allocation6], 1024
        $region84: #{tpu_custom_call.1} parent=71 // pred_fallthru
          _
        // Predicated region
        $region85: #{tpu_custom_call.1} parent=71 // pred_check
          %p462 = pneg %p240
        $region86: #{tpu_custom_call.1} parent=71 // pred_check_branch
          %464 = sbr.rel (%p462) target = $region88
        $region87: #{tpu_custom_call.1} parent=71 // pred_region
          %465 = dma.done [#allocation9], 1024
        $region88: #{tpu_custom_call.1} parent=71 // pred_fallthru
          _
        // Predicated region
        $region89: #{tpu_custom_call.1} parent=71 // pred_check
          %p466 = pneg %p282
        $region90: #{tpu_custom_call.1} parent=71 // pred_check_branch
          %468 = sbr.rel (%p466) target = $region92
        $region91: #{tpu_custom_call.1} parent=71 // pred_region
          %469 = dma.done [#allocation9], 1024
        $region92: #{tpu_custom_call.1} parent=71 // pred_fallthru
          _
        %s470 = smul.u32 2, %s30
        %p471 = scmp.lt.s32.totalorder %s470, 11
        %s472 = scalar_select %p471, %s470, 11
        %s473 = smul.addr %s472, 4
        %s474 = scalar_lea.vmem %s0, %s473
        %p475 = pneg %p51
        %p476 = pneg %p48
        %p477 = pneg %p72
        %p478 = pneg %p69
        %p479 = pneg %p93
        %p480 = pneg %p90
        %p481 = pneg %p114
        %p482 = pneg %p111
        %p483 = pneg %p135
        %p484 = pneg %p132
        %p485 = pneg %p156
        %p486 = pneg %p153
        %p487 = pneg %p177
        %p488 = pneg %p174
        %p489 = pneg %p198
        %p490 = pneg %p195
        %p491 = pneg %p219
        %p492 = pneg %p216
        %p493 = pneg %p240
        %p494 = pneg %p237
        %p495 = pneg %p261
        %p496 = pneg %p258
        %p497 = pneg %p282
        %p498 = pneg %p279
        %p499 = pneg %p303
        %p500 = pneg %p300
        %p501 = pneg %p329
        %p502 = pneg %p326
        %s503 = sand.u32 %s316, 1
        %s504 = scalar_lea.sflag [#allocation4], %s503
        %s505 = sand.u32 %s316, 1
        %s506 = smul.addr %s505, 8
        %s507 = scalar_lea.vmem [#allocation11], %s506
        %s508 = smul.u32 2, %s30
        %p509 = scmp.lt.s32.totalorder %s508, 11
        %s510 = scalar_select %p509, %s508, 11
        %s511 = smul.addr %s510, 4
        %s512 = scalar_lea.vmem %s0, %s511
        %s513 = smul.u32 2, %s30
        %s514 = smul.u32 2, %s30
        %v516 = vld [vmem:[%s512] sm:$0xf]
        %v517 = vld [vmem:[%s512 + $0x4] sm:$0xf]
        %v518 = vld [vmem:[#allocation2] sm:$0xf]
        %v519 = vld [vmem:[#allocation2 + $0x4] sm:$0xf]
        %v520 = vld [vmem:[#allocation2 + $0x8] sm:$0xf]
        %v521 = vld [vmem:[#allocation2 + $0xc] sm:$0xf]
        %v522 = vld [vmem:[%s2] sm:$0x1]
        %v524 = vlaneseq
        %v525 = vshrl.u32 %v524, 7
        %v526 = vsub.s32 0, %v525
        %v527 = vrot.slane %v522, %v526
        %v531 = vunpack.c.l.b16 %v516
        %v532 = vunpack.c.l.b16 %v517
        %v533 = vpack.c.b16 %v532, %v531
        %v538 = vunpack.c.l.b16 %v518
        %v539 = vunpack.c.l.b16 %v519
        %v540 = vunpack.c.l.b16 %v520
        %v541 = vunpack.c.l.b16 %v521
        %v542 = vpack.c.b16 %v539, %v538
        %v543 = vpack.c.b16 %v541, %v540
        %vm546 = vcmask 261120
        %v548 = vsel %vm546, %v533, 0
        %550 = vmatprep.subr.bf16.mxu0 0
        %551 = vmatpush1.bf16.msra.mxu0 0
        %552 = vmatprep.subr.bf16.mxu0 0
        %553 = vmatpush1.bf16.msra.mxu0 0
        %554 = vmatprep.subr.bf16.mxu0 0
        %555 = vmatpush1.bf16.msra.mxu0 0
        %556 = vmatprep.subr.bf16.mxu0 0
        %557 = vmatpush1.bf16.msra.mxu0 0
        %558 = vmatprep.subr.bf16.mxu0 0
        %559 = vmatpush1.bf16.msra.mxu0 0
        %560 = vmatprep.subr.bf16.mxu0 0
        %561 = vmatpush1.bf16.msra.mxu0 0
        %562 = vmatprep.subr.bf16.mxu0 0
        %563 = vmatpush1.bf16.msra.mxu0 %v543
        %564 = vmatprep.subr.bf16.mxu0 0
        %565 = vmatpush1.bf16.msra.mxu0 %v542
        %566 = vmatprep.subr.bf16.mxu0 0
        %567 = vmatpush2.bf16.msra.mxu0 0
        %568 = vmatprep.subr.bf16.mxu0 0
        %569 = vmatpush2.bf16.msra.mxu0 0
        %570 = vmatprep.subr.bf16.mxu0 0
        %571 = vmatpush2.bf16.msra.mxu0 0
        %572 = vmatprep.subr.bf16.mxu0 0
        %573 = vmatpush2.bf16.msra.mxu0 0
        %574 = vmatprep.subr.bf16.mxu0 0
        %575 = vmatpush2.bf16.msra.mxu0 0
        %576 = vmatprep.subr.bf16.mxu0 0
        %577 = vmatpush2.bf16.msra.mxu0 0
        %578 = vmatprep.subr.bf16.mxu0 0
        %579 = vmatpush2.bf16.msra.mxu0 0
        %580 = vmatprep.subr.bf16.mxu0 0
        %581 = vmatpush2.bf16.msra.mxu0 0
        %582 = vmatprep.mubr.bf16.mxu0 0
        %583 = vmatmul.mubr.bf16.gmra.mxu0 %v548
        %v584 = vpop.f32.mrf.mxu0
        %v585 = vadd.f32 %v527, %v584
        %v586 = vpop.f32.mrf.mxu0
        %v587 = vpop.f32.mrf.mxu0
        %v588 = vadd.f32 %v527, %v587
        %v589 = vpop.f32.mrf.mxu0
        %590 = vdwg.mxu0
        %v591 = vmax.f32 %v585, 0.0
        %v592 = vmax.f32 %v588, 0.0
        %v593 = vpack.c.bf16 %v592, %v591
        %v594 = vld [vmem:[%s3] sm:$0xf]
        %v595 = vld [vmem:[%s3 + $0x4] sm:$0xf]
        %v596 = vld [vmem:[%s3 + $0x8] sm:$0xf]
        %v597 = vld [vmem:[%s3 + $0xc] sm:$0xf]
        %v598 = vld [vmem:[%s3 + $0x10] sm:$0xf]
        %v599 = vld [vmem:[%s3 + $0x14] sm:$0xf]
        %v600 = vld [vmem:[%s3 + $0x18] sm:$0xf]
        %v601 = vld [vmem:[%s3 + $0x1c] sm:$0xf]
        %v602 = vld [vmem:[%s3 + $0x20] sm:$0xf]
        %v603 = vld [vmem:[%s3 + $0x24] sm:$0xf]
        %v604 = vld [vmem:[%s3 + $0x28] sm:$0xf]
        %v605 = vld [vmem:[%s3 + $0x2c] sm:$0xf]
        %v606 = vld [vmem:[%s3 + $0x30] sm:$0xf]
        %v607 = vld [vmem:[%s3 + $0x34] sm:$0xf]
        %v608 = vld [vmem:[%s3 + $0x38] sm:$0xf]
        %v609 = vld [vmem:[%s3 + $0x3c] sm:$0xf]
        %v610 = vld [vmem:[%s4] sm:$0x1]
        %v612 = vlaneseq
        %v613 = vshrl.u32 %v612, 7
        %v614 = vsub.s32 0, %v613
        %v615 = vrot.slane %v610, %v614
        %v633 = vunpack.c.l.b16 %v594
        %v634 = vunpack.c.l.b16 %v595
        %v635 = vunpack.c.l.b16 %v596
        %v636 = vunpack.c.l.b16 %v597
        %v637 = vunpack.c.l.b16 %v598
        %v638 = vunpack.c.l.b16 %v599
        %v639 = vunpack.c.l.b16 %v600
        %v640 = vunpack.c.l.b16 %v601
        %v641 = vunpack.c.l.b16 %v602
        %v642 = vunpack.c.l.b16 %v603
        %v643 = vunpack.c.l.b16 %v604
        %v644 = vunpack.c.l.b16 %v605
        %v645 = vunpack.c.l.b16 %v606
        %v646 = vunpack.c.l.b16 %v607
        %v647 = vunpack.c.l.b16 %v608
        %v648 = vunpack.c.l.b16 %v609
        %v649 = vpack.c.b16 %v634, %v633
        %v650 = vpack.c.b16 %v636, %v635
        %v651 = vpack.c.b16 %v638, %v637
        %v652 = vpack.c.b16 %v640, %v639
        %v653 = vpack.c.b16 %v642, %v641
        %v654 = vpack.c.b16 %v644, %v643
        %v655 = vpack.c.b16 %v646, %v645
        %v656 = vpack.c.b16 %v648, %v647
        %665 = vmatprep.subr.bf16.mxu0 0
        %666 = vmatpush1.bf16.msra.mxu0 %v656
        %667 = vmatprep.subr.bf16.mxu0 0
        %668 = vmatpush1.bf16.msra.mxu0 %v655
        %669 = vmatprep.subr.bf16.mxu0 0
        %670 = vmatpush1.bf16.msra.mxu0 %v654
        %671 = vmatprep.subr.bf16.mxu0 0
        %672 = vmatpush1.bf16.msra.mxu0 %v653
        %673 = vmatprep.subr.bf16.mxu0 0
        %674 = vmatpush1.bf16.msra.mxu0 %v652
        %675 = vmatprep.subr.bf16.mxu0 0
        %676 = vmatpush1.bf16.msra.mxu0 %v651
        %677 = vmatprep.subr.bf16.mxu0 0
        %678 = vmatpush1.bf16.msra.mxu0 %v650
        %679 = vmatprep.subr.bf16.mxu0 0
        %680 = vmatpush1.bf16.msra.mxu0 %v649
        %681 = vmatprep.subr.bf16.mxu0 0
        %682 = vmatpush2.bf16.msra.mxu0 0
        %683 = vmatprep.subr.bf16.mxu0 0
        %684 = vmatpush2.bf16.msra.mxu0 0
        %685 = vmatprep.subr.bf16.mxu0 0
        %686 = vmatpush2.bf16.msra.mxu0 0
        %687 = vmatprep.subr.bf16.mxu0 0
        %688 = vmatpush2.bf16.msra.mxu0 0
        %689 = vmatprep.subr.bf16.mxu0 0
        %690 = vmatpush2.bf16.msra.mxu0 0
        %691 = vmatprep.subr.bf16.mxu0 0
        %692 = vmatpush2.bf16.msra.mxu0 0
        %693 = vmatprep.subr.bf16.mxu0 0
        %694 = vmatpush2.bf16.msra.mxu0 0
        %695 = vmatprep.subr.bf16.mxu0 0
        %696 = vmatpush2.bf16.msra.mxu0 0
        %697 = vmatprep.mubr.bf16.mxu0 0
        %698 = vmatmul.mubr.bf16.gmra.mxu0 %v593
        %v699 = vpop.f32.mrf.mxu0
        %v700 = vadd.f32 %v615, %v699
        %v701 = vpop.f32.mrf.mxu0
        %v702 = vpop.f32.mrf.mxu0
        %v703 = vadd.f32 %v615, %v702
        %v704 = vpop.f32.mrf.mxu0
        %705 = vdwg.mxu0
        %v706 = vmax.f32 %v700, 0.0
        %v707 = vmax.f32 %v703, 0.0
        %v708 = vpack.c.bf16 %v707, %v706
        %v709 = vld [vmem:[#allocation5] sm:$0xf]
        %v710 = vld [vmem:[#allocation5 + $0x4] sm:$0xf]
        %v711 = vld [vmem:[#allocation5 + $0x8] sm:$0xf]
        %v712 = vld [vmem:[#allocation5 + $0xc] sm:$0xf]
        %v713 = vld [vmem:[#allocation5 + $0x10] sm:$0xf]
        %v714 = vld [vmem:[#allocation5 + $0x14] sm:$0xf]
        %v715 = vld [vmem:[#allocation5 + $0x18] sm:$0xf]
        %v716 = vld [vmem:[#allocation5 + $0x1c] sm:$0xf]
        %v717 = vld [vmem:[#allocation5 + $0x20] sm:$0xf]
        %v718 = vld [vmem:[#allocation5 + $0x24] sm:$0xf]
        %v719 = vld [vmem:[#allocation5 + $0x28] sm:$0xf]
        %v720 = vld [vmem:[#allocation5 + $0x2c] sm:$0xf]
        %v721 = vld [vmem:[#allocation5 + $0x30] sm:$0xf]
        %v722 = vld [vmem:[#allocation5 + $0x34] sm:$0xf]
        %v723 = vld [vmem:[#allocation5 + $0x38] sm:$0xf]
        %v724 = vld [vmem:[#allocation5 + $0x3c] sm:$0xf]
        %v725 = vld [vmem:[%s6] sm:$0x1]
        %v727 = vlaneseq
        %v728 = vshrl.u32 %v727, 7
        %v729 = vsub.s32 0, %v728
        %v730 = vrot.slane %v725, %v729
        %v748 = vunpack.c.l.b16 %v709
        %v749 = vunpack.c.l.b16 %v710
        %v750 = vunpack.c.l.b16 %v711
        %v751 = vunpack.c.l.b16 %v712
        %v752 = vunpack.c.l.b16 %v713
        %v753 = vunpack.c.l.b16 %v714
        %v754 = vunpack.c.l.b16 %v715
        %v755 = vunpack.c.l.b16 %v716
        %v756 = vunpack.c.l.b16 %v717
        %v757 = vunpack.c.l.b16 %v718
        %v758 = vunpack.c.l.b16 %v719
        %v759 = vunpack.c.l.b16 %v720
        %v760 = vunpack.c.l.b16 %v721
        %v761 = vunpack.c.l.b16 %v722
        %v762 = vunpack.c.l.b16 %v723
        %v763 = vunpack.c.l.b16 %v724
        %v764 = vpack.c.b16 %v749, %v748
        %v765 = vpack.c.b16 %v751, %v750
        %v766 = vpack.c.b16 %v753, %v752
        %v767 = vpack.c.b16 %v755, %v754
        %v768 = vpack.c.b16 %v757, %v756
        %v769 = vpack.c.b16 %v759, %v758
        %v770 = vpack.c.b16 %v761, %v760
        %v771 = vpack.c.b16 %v763, %v762
        %780 = vmatprep.subr.bf16.mxu0 0
        %781 = vmatpush1.bf16.msra.mxu0 %v771
        %782 = vmatprep.subr.bf16.mxu0 0
        %783 = vmatpush1.bf16.msra.mxu0 %v770
        %784 = vmatprep.subr.bf16.mxu0 0
        %785 = vmatpush1.bf16.msra.mxu0 %v769
        %786 = vmatprep.subr.bf16.mxu0 0
        %787 = vmatpush1.bf16.msra.mxu0 %v768
        %788 = vmatprep.subr.bf16.mxu0 0
        %789 = vmatpush1.bf16.msra.mxu0 %v767
        %790 = vmatprep.subr.bf16.mxu0 0
        %791 = vmatpush1.bf16.msra.mxu0 %v766
        %792 = vmatprep.subr.bf16.mxu0 0
        %793 = vmatpush1.bf16.msra.mxu0 %v765
        %794 = vmatprep.subr.bf16.mxu0 0
        %795 = vmatpush1.bf16.msra.mxu0 %v764
        %796 = vmatprep.subr.bf16.mxu0 0
        %797 = vmatpush2.bf16.msra.mxu0 0
        %798 = vmatprep.subr.bf16.mxu0 0
        %799 = vmatpush2.bf16.msra.mxu0 0
        %800 = vmatprep.subr.bf16.mxu0 0
        %801 = vmatpush2.bf16.msra.mxu0 0
        %802 = vmatprep.subr.bf16.mxu0 0
        %803 = vmatpush2.bf16.msra.mxu0 0
        %804 = vmatprep.subr.bf16.mxu0 0
        %805 = vmatpush2.bf16.msra.mxu0 0
        %806 = vmatprep.subr.bf16.mxu0 0
        %807 = vmatpush2.bf16.msra.mxu0 0
        %808 = vmatprep.subr.bf16.mxu0 0
        %809 = vmatpush2.bf16.msra.mxu0 0
        %810 = vmatprep.subr.bf16.mxu0 0
        %811 = vmatpush2.bf16.msra.mxu0 0
        %812 = vmatprep.mubr.bf16.mxu0 0
        %813 = vmatmul.mubr.bf16.gmra.mxu0 %v708
        %v814 = vpop.f32.mrf.mxu0
        %v815 = vadd.f32 %v730, %v814
        %v816 = vpop.f32.mrf.mxu0
        %v817 = vpop.f32.mrf.mxu0
        %v818 = vadd.f32 %v730, %v817
        %v819 = vpop.f32.mrf.mxu0
        %820 = vdwg.mxu0
        %v821 = vmax.f32 %v815, 0.0
        %v822 = vmax.f32 %v818, 0.0
        %v823 = vpack.c.bf16 %v822, %v821
        %v824 = vld [vmem:[#allocation7] sm:$0xf]
        %v825 = vld [vmem:[#allocation7 + $0x4] sm:$0xf]
        %v826 = vld [vmem:[#allocation7 + $0x8] sm:$0xf]
        %v827 = vld [vmem:[#allocation7 + $0xc] sm:$0xf]
        %v828 = vld [vmem:[#allocation7 + $0x10] sm:$0xf]
        %v829 = vld [vmem:[#allocation7 + $0x14] sm:$0xf]
        %v830 = vld [vmem:[#allocation7 + $0x18] sm:$0xf]
        %v831 = vld [vmem:[#allocation7 + $0x1c] sm:$0xf]
        %v832 = vld [vmem:[#allocation7 + $0x20] sm:$0xf]
        %v833 = vld [vmem:[#allocation7 + $0x24] sm:$0xf]
        %v834 = vld [vmem:[#allocation7 + $0x28] sm:$0xf]
        %v835 = vld [vmem:[#allocation7 + $0x2c] sm:$0xf]
        %v836 = vld [vmem:[#allocation7 + $0x30] sm:$0xf]
        %v837 = vld [vmem:[#allocation7 + $0x34] sm:$0xf]
        %v838 = vld [vmem:[#allocation7 + $0x38] sm:$0xf]
        %v839 = vld [vmem:[#allocation7 + $0x3c] sm:$0xf]
        %v840 = vld [vmem:[%s8] sm:$0x1]
        %v842 = vlaneseq
        %v843 = vshrl.u32 %v842, 7
        %v844 = vsub.s32 0, %v843
        %v845 = vrot.slane %v840, %v844
        %v863 = vunpack.c.l.b16 %v824
        %v864 = vunpack.c.l.b16 %v825
        %v865 = vunpack.c.l.b16 %v826
        %v866 = vunpack.c.l.b16 %v827
        %v867 = vunpack.c.l.b16 %v828
        %v868 = vunpack.c.l.b16 %v829
        %v869 = vunpack.c.l.b16 %v830
        %v870 = vunpack.c.l.b16 %v831
        %v871 = vunpack.c.l.b16 %v832
        %v872 = vunpack.c.l.b16 %v833
        %v873 = vunpack.c.l.b16 %v834
        %v874 = vunpack.c.l.b16 %v835
        %v875 = vunpack.c.l.b16 %v836
        %v876 = vunpack.c.l.b16 %v837
        %v877 = vunpack.c.l.b16 %v838
        %v878 = vunpack.c.l.b16 %v839
        %v879 = vpack.c.b16 %v864, %v863
        %v880 = vpack.c.b16 %v866, %v865
        %v881 = vpack.c.b16 %v868, %v867
        %v882 = vpack.c.b16 %v870, %v869
        %v883 = vpack.c.b16 %v872, %v871
        %v884 = vpack.c.b16 %v874, %v873
        %v885 = vpack.c.b16 %v876, %v875
        %v886 = vpack.c.b16 %v878, %v877
        %895 = vmatprep.subr.bf16.mxu0 0
        %896 = vmatpush1.bf16.msra.mxu0 %v886
        %897 = vmatprep.subr.bf16.mxu0 0
        %898 = vmatpush1.bf16.msra.mxu0 %v885
        %899 = vmatprep.subr.bf16.mxu0 0
        %900 = vmatpush1.bf16.msra.mxu0 %v884
        %901 = vmatprep.subr.bf16.mxu0 0
        %902 = vmatpush1.bf16.msra.mxu0 %v883
        %903 = vmatprep.subr.bf16.mxu0 0
        %904 = vmatpush1.bf16.msra.mxu0 %v882
        %905 = vmatprep.subr.bf16.mxu0 0
        %906 = vmatpush1.bf16.msra.mxu0 %v881
        %907 = vmatprep.subr.bf16.mxu0 0
        %908 = vmatpush1.bf16.msra.mxu0 %v880
        %909 = vmatprep.subr.bf16.mxu0 0
        %910 = vmatpush1.bf16.msra.mxu0 %v879
        %911 = vmatprep.subr.bf16.mxu0 0
        %912 = vmatpush2.bf16.msra.mxu0 0
        %913 = vmatprep.subr.bf16.mxu0 0
        %914 = vmatpush2.bf16.msra.mxu0 0
        %915 = vmatprep.subr.bf16.mxu0 0
        %916 = vmatpush2.bf16.msra.mxu0 0
        %917 = vmatprep.subr.bf16.mxu0 0
        %918 = vmatpush2.bf16.msra.mxu0 0
        %919 = vmatprep.subr.bf16.mxu0 0
        %920 = vmatpush2.bf16.msra.mxu0 0
        %921 = vmatprep.subr.bf16.mxu0 0
        %922 = vmatpush2.bf16.msra.mxu0 0
        %923 = vmatprep.subr.bf16.mxu0 0
        %924 = vmatpush2.bf16.msra.mxu0 0
        %925 = vmatprep.subr.bf16.mxu0 0
        %926 = vmatpush2.bf16.msra.mxu0 0
        %927 = vmatprep.mubr.bf16.mxu0 0
        %928 = vmatmul.mubr.bf16.gmra.mxu0 %v823
        %v929 = vpop.f32.mrf.mxu0
        %v930 = vadd.f32 %v845, %v929
        %v931 = vpop.f32.mrf.mxu0
        %v932 = vpop.f32.mrf.mxu0
        %v933 = vadd.f32 %v845, %v932
        %v934 = vpop.f32.mrf.mxu0
        %935 = vdwg.mxu0
        %v936 = vmax.f32 %v930, 0.0
        %v937 = vmax.f32 %v933, 0.0
        %v938 = vpack.c.bf16 %v937, %v936
        %v939 = vld [vmem:[#allocation8] sm:$0xf]
        %v940 = vld [vmem:[#allocation8 + $0x4] sm:$0xf]
        %v941 = vld [vmem:[#allocation8 + $0x8] sm:$0xf]
        %v942 = vld [vmem:[#allocation8 + $0xc] sm:$0xf]
        %v943 = vld [vmem:[#allocation8 + $0x10] sm:$0xf]
        %v944 = vld [vmem:[#allocation8 + $0x14] sm:$0xf]
        %v945 = vld [vmem:[#allocation8 + $0x18] sm:$0xf]
        %v946 = vld [vmem:[#allocation8 + $0x1c] sm:$0xf]
        %v947 = vld [vmem:[#allocation8 + $0x20] sm:$0xf]
        %v948 = vld [vmem:[#allocation8 + $0x24] sm:$0xf]
        %v949 = vld [vmem:[#allocation8 + $0x28] sm:$0xf]
        %v950 = vld [vmem:[#allocation8 + $0x2c] sm:$0xf]
        %v951 = vld [vmem:[#allocation8 + $0x30] sm:$0xf]
        %v952 = vld [vmem:[#allocation8 + $0x34] sm:$0xf]
        %v953 = vld [vmem:[#allocation8 + $0x38] sm:$0xf]
        %v954 = vld [vmem:[#allocation8 + $0x3c] sm:$0xf]
        %v955 = vld [vmem:[%s10] sm:$0x1]
        %v957 = vlaneseq
        %v958 = vshrl.u32 %v957, 7
        %v959 = vsub.s32 0, %v958
        %v960 = vrot.slane %v955, %v959
        %v978 = vunpack.c.l.b16 %v939
        %v979 = vunpack.c.l.b16 %v940
        %v980 = vunpack.c.l.b16 %v941
        %v981 = vunpack.c.l.b16 %v942
        %v982 = vunpack.c.l.b16 %v943
        %v983 = vunpack.c.l.b16 %v944
        %v984 = vunpack.c.l.b16 %v945
        %v985 = vunpack.c.l.b16 %v946
        %v986 = vunpack.c.l.b16 %v947
        %v987 = vunpack.c.l.b16 %v948
        %v988 = vunpack.c.l.b16 %v949
        %v989 = vunpack.c.l.b16 %v950
        %v990 = vunpack.c.l.b16 %v951
        %v991 = vunpack.c.l.b16 %v952
        %v992 = vunpack.c.l.b16 %v953
        %v993 = vunpack.c.l.b16 %v954
        %v994 = vpack.c.b16 %v979, %v978
        %v995 = vpack.c.b16 %v981, %v980
        %v996 = vpack.c.b16 %v983, %v982
        %v997 = vpack.c.b16 %v985, %v984
        %v998 = vpack.c.b16 %v987, %v986
        %v999 = vpack.c.b16 %v989, %v988
        %v1000 = vpack.c.b16 %v991, %v990
        %v1001 = vpack.c.b16 %v993, %v992
        %1010 = vmatprep.subr.bf16.mxu0 0
        %1011 = vmatpush1.bf16.msra.mxu0 %v1001
        %1012 = vmatprep.subr.bf16.mxu0 0
        %1013 = vmatpush1.bf16.msra.mxu0 %v1000
        %1014 = vmatprep.subr.bf16.mxu0 0
        %1015 = vmatpush1.bf16.msra.mxu0 %v999
        %1016 = vmatprep.subr.bf16.mxu0 0
        %1017 = vmatpush1.bf16.msra.mxu0 %v998
        %1018 = vmatprep.subr.bf16.mxu0 0
        %1019 = vmatpush1.bf16.msra.mxu0 %v997
        %1020 = vmatprep.subr.bf16.mxu0 0
        %1021 = vmatpush1.bf16.msra.mxu0 %v996
        %1022 = vmatprep.subr.bf16.mxu0 0
        %1023 = vmatpush1.bf16.msra.mxu0 %v995
        %1024 = vmatprep.subr.bf16.mxu0 0
        %1025 = vmatpush1.bf16.msra.mxu0 %v994
        %1026 = vmatprep.subr.bf16.mxu0 0
        %1027 = vmatpush2.bf16.msra.mxu0 0
        %1028 = vmatprep.subr.bf16.mxu0 0
        %1029 = vmatpush2.bf16.msra.mxu0 0
        %1030 = vmatprep.subr.bf16.mxu0 0
        %1031 = vmatpush2.bf16.msra.mxu0 0
        %1032 = vmatprep.subr.bf16.mxu0 0
        %1033 = vmatpush2.bf16.msra.mxu0 0
        %1034 = vmatprep.subr.bf16.mxu0 0
        %1035 = vmatpush2.bf16.msra.mxu0 0
        %1036 = vmatprep.subr.bf16.mxu0 0
        %1037 = vmatpush2.bf16.msra.mxu0 0
        %1038 = vmatprep.subr.bf16.mxu0 0
        %1039 = vmatpush2.bf16.msra.mxu0 0
        %1040 = vmatprep.subr.bf16.mxu0 0
        %1041 = vmatpush2.bf16.msra.mxu0 0
        %1042 = vmatprep.mubr.bf16.mxu0 0
        %1043 = vmatmul.mubr.bf16.gmra.mxu0 %v938
        %v1044 = vpop.f32.mrf.mxu0
        %v1045 = vadd.f32 %v960, %v1044
        %v1046 = vpop.f32.mrf.mxu0
        %v1047 = vpop.f32.mrf.mxu0
        %v1048 = vadd.f32 %v960, %v1047
        %v1049 = vpop.f32.mrf.mxu0
        %1050 = vdwg.mxu0
        %v1051 = vmax.f32 %v1045, 0.0
        %v1052 = vmax.f32 %v1048, 0.0
        %v1053 = vpack.c.bf16 %v1052, %v1051
        %v1054 = vld [vmem:[#allocation10] sm:$0xf]
        %v1055 = vld [vmem:[#allocation10 + $0x4] sm:$0xf]
        %v1056 = vld [vmem:[#allocation10 + $0x8] sm:$0xf]
        %v1057 = vld [vmem:[#allocation10 + $0xc] sm:$0xf]
        %v1058 = vld [vmem:[#allocation10 + $0x10] sm:$0xf]
        %v1059 = vld [vmem:[#allocation10 + $0x14] sm:$0xf]
        %v1060 = vld [vmem:[#allocation10 + $0x18] sm:$0xf]
        %v1061 = vld [vmem:[#allocation10 + $0x1c] sm:$0xf]
        %v1062 = vld [vmem:[#allocation10 + $0x20] sm:$0xf]
        %v1063 = vld [vmem:[#allocation10 + $0x24] sm:$0xf]
        %v1064 = vld [vmem:[#allocation10 + $0x28] sm:$0xf]
        %v1065 = vld [vmem:[#allocation10 + $0x2c] sm:$0xf]
        %v1066 = vld [vmem:[#allocation10 + $0x30] sm:$0xf]
        %v1067 = vld [vmem:[#allocation10 + $0x34] sm:$0xf]
        %v1068 = vld [vmem:[#allocation10 + $0x38] sm:$0xf]
        %v1069 = vld [vmem:[#allocation10 + $0x3c] sm:$0xf]
        %v1070 = vld [vmem:[%s12] sm:$0x1]
        %v1072 = vlaneseq
        %v1073 = vshrl.u32 %v1072, 7
        %v1074 = vsub.s32 0, %v1073
        %v1075 = vrot.slane %v1070, %v1074
        %v1093 = vunpack.c.l.b16 %v1054
        %v1094 = vunpack.c.l.b16 %v1055
        %v1095 = vunpack.c.l.b16 %v1056
        %v1096 = vunpack.c.l.b16 %v1057
        %v1097 = vunpack.c.l.b16 %v1058
        %v1098 = vunpack.c.l.b16 %v1059
        %v1099 = vunpack.c.l.b16 %v1060
        %v1100 = vunpack.c.l.b16 %v1061
        %v1101 = vunpack.c.l.b16 %v1062
        %v1102 = vunpack.c.l.b16 %v1063
        %v1103 = vunpack.c.l.b16 %v1064
        %v1104 = vunpack.c.l.b16 %v1065
        %v1105 = vunpack.c.l.b16 %v1066
        %v1106 = vunpack.c.l.b16 %v1067
        %v1107 = vunpack.c.l.b16 %v1068
        %v1108 = vunpack.c.l.b16 %v1069
        %v1109 = vpack.c.b16 %v1094, %v1093
        %v1110 = vpack.c.b16 %v1096, %v1095
        %v1111 = vpack.c.b16 %v1098, %v1097
        %v1112 = vpack.c.b16 %v1100, %v1099
        %v1113 = vpack.c.b16 %v1102, %v1101
        %v1114 = vpack.c.b16 %v1104, %v1103
        %v1115 = vpack.c.b16 %v1106, %v1105
        %v1116 = vpack.c.b16 %v1108, %v1107
        %1125 = vmatprep.subr.bf16.mxu0 0
        %1126 = vmatpush1.bf16.msra.mxu0 %v1116
        %1127 = vmatprep.subr.bf16.mxu0 0
        %1128 = vmatpush1.bf16.msra.mxu0 %v1115
        %1129 = vmatprep.subr.bf16.mxu0 0
        %1130 = vmatpush1.bf16.msra.mxu0 %v1114
        %1131 = vmatprep.subr.bf16.mxu0 0
        %1132 = vmatpush1.bf16.msra.mxu0 %v1113
        %1133 = vmatprep.subr.bf16.mxu0 0
        %1134 = vmatpush1.bf16.msra.mxu0 %v1112
        %1135 = vmatprep.subr.bf16.mxu0 0
        %1136 = vmatpush1.bf16.msra.mxu0 %v1111
        %1137 = vmatprep.subr.bf16.mxu0 0
        %1138 = vmatpush1.bf16.msra.mxu0 %v1110
        %1139 = vmatprep.subr.bf16.mxu0 0
        %1140 = vmatpush1.bf16.msra.mxu0 %v1109
        %1141 = vmatprep.subr.bf16.mxu0 0
        %1142 = vmatpush2.bf16.msra.mxu0 0
        %1143 = vmatprep.subr.bf16.mxu0 0
        %1144 = vmatpush2.bf16.msra.mxu0 0
        %1145 = vmatprep.subr.bf16.mxu0 0
        %1146 = vmatpush2.bf16.msra.mxu0 0
        %1147 = vmatprep.subr.bf16.mxu0 0
        %1148 = vmatpush2.bf16.msra.mxu0 0
        %1149 = vmatprep.subr.bf16.mxu0 0
        %1150 = vmatpush2.bf16.msra.mxu0 0
        %1151 = vmatprep.subr.bf16.mxu0 0
        %1152 = vmatpush2.bf16.msra.mxu0 0
        %1153 = vmatprep.subr.bf16.mxu0 0
        %1154 = vmatpush2.bf16.msra.mxu0 0
        %1155 = vmatprep.subr.bf16.mxu0 0
        %1156 = vmatpush2.bf16.msra.mxu0 0
        %1157 = vmatprep.mubr.bf16.mxu0 0
        %1158 = vmatmul.mubr.bf16.gmra.mxu0 %v1053
        %v1159 = vpop.f32.mrf.mxu0
        %v1160 = vadd.f32 %v1075, %v1159
        %v1161 = vpop.f32.mrf.mxu0
        %v1162 = vpop.f32.mrf.mxu0
        %v1163 = vadd.f32 %v1075, %v1162
        %v1164 = vpop.f32.mrf.mxu0
        %1165 = vdwg.mxu0
        %v1166 = vpack.c.bf16 %v1163, %v1160
        %v1168 = vunpack.c.l.b16 %v1166
        %v1169 = vunpack.c.h.b16 %v1166
        %v1170 = vpack.c.b16 %v1168, %v1168
        %v1171 = vpack.c.b16 %v1169, %v1169
        %1174 = vst [vmem:[%s507] sm:$0xf] %v1170
        %1175 = vst [vmem:[%s507 + $0x4] sm:$0xf] %v1171
        %s1176 = sand.u32 %s316, 1
        %s1177 = scalar_lea.sflag [#allocation4], %s1176
        %s1178 = sand.u32 %s316, 1
        %s1179 = smul.addr %s1178, 8
        %s1180 = scalar_lea.vmem [#allocation11], %s1179
        // Predicated region
        $region93: #{tpu_custom_call.1} parent=71 // pred_check
          %p1181 = pneg %p326
        $region94: #{tpu_custom_call.1} parent=71 // pred_check_branch
          %1183 = sbr.rel (%p1181) target = $region96
        $region95: #{tpu_custom_call.1} parent=71 // pred_region
          %s1184 = smul.u32 2, %s30
          %s1186 = ssub.s32 128, 128
          %1187 = vsyncadd %s1177, %s1186
          %s1188 = smul.addr %s1184, 64
          %s1189 = scalar_lea.hbm %s13, %s1188
          %s1190 = sshll.u32 %s1180, 4
          %s1191 = int_to_ptr.vmem [resolvable:$true] %s1190
          %1196 = dma.vmem_to_hbm [thread:$0]  %s1191, 128, %s1189, %s1177, 64, 64, 4
        $region96: #{tpu_custom_call.1} parent=71 // pred_fallthru
          _
      $region72: #{tpu_custom_call.1} parent=5 // pred_fallthru
        _
      %p1197 = scmp.le.s32.totalorder 2, %s25
      // Predicated region
      $region97: #{tpu_custom_call.1} parent=5 // pred_check
        %p1198 = pneg %p1197
      $region98: #{tpu_custom_call.1} parent=5 // pred_check_branch
        %1200 = sbr.rel (%p1198) target = $region100
      $region99: #{tpu_custom_call.1} parent=5 // pred_region
        %s1201 = ssub.s32 %s25, 2
        // Predicated region
        $region101: #{tpu_custom_call.1} parent=99 // pred_check
          %p1202 = pneg %p332
        $region102: #{tpu_custom_call.1} parent=99 // pred_check_branch
          %1204 = sbr.rel (%p1202) target = $region104
        $region103: #{tpu_custom_call.1} parent=99 // pred_region
          %s1205 = sand.u32 %s317, 1
          %s1206 = scalar_lea.sflag [#allocation4], %s1205
          %s1207 = sand.u32 %s317, 1
          %s1208 = smul.addr %s1207, 8
          %s1209 = scalar_lea.vmem [#allocation11], %s1208
          %1210 = dma.done %s1206, 128
        $region104: #{tpu_custom_call.1} parent=99 // pred_fallthru
          _
      $region100: #{tpu_custom_call.1} parent=5 // pred_fallthru
        _
    $region6: #{tpu_custom_call.1} parent=1 // loop_footer
      %s29 = sadd.s32 1, %s25
    $region7: #{tpu_custom_call.1} parent=1 // loop_footer_branch
      %24 = sbr.rel target = $region3
    $region8: #{tpu_custom_call.1} parent=1 // loop_exit
      _
    %1211 = vsyncpa [#allocation3], 1
    %s1212 = scalar_lea.sflag [#allocation3], 1
    %1213 = vsyncpa %s1212, 1
    %1214 = vsyncpa [#allocation6], 1
    %1215 = vsyncpa [#allocation9], 1
    %1216 = vsyncpa [#allocation4], 1
    %s1217 = scalar_lea.sflag [#allocation4], 1
    %1218 = vsyncpa %s1217, 1

</llo_original>
